<compile_context>
chip_gen: v6e
topology: v6e:2x2x1
jax: 0.10.0
libtpu: 0.0.40
codegen_flags: <defaults>
</compile_context>

<pallas_src>
import jax
import jax.numpy as jnp
from jax import lax
from jax.experimental import pallas as pl
from jax.experimental.pallas import tpu as pltpu


# --------------------------------------------------------------------------
# Single-pass kernel: one (N, block_d) tile, reduce over dim 0 in-register.
# --------------------------------------------------------------------------
def _softmax_dim0_kernel(x_ref, o_ref):
    e = jnp.exp(x_ref[...].astype(jnp.float32))
    s = jnp.sum(e, axis=0, keepdims=True)          # (1, block_d) — XLU reduce
    inv = pl.reciprocal(s, approx=False)           # exact; tolerance is 1e-5
    o_ref[...] = (e * inv).astype(o_ref.dtype)


# --------------------------------------------------------------------------
# Helpers
# --------------------------------------------------------------------------
def _default_vmem_budget_bytes():
    """Chip-aware VMEM budget for tile sizing (conservative, trace-time)."""
    cap = None
    try:
        info = pltpu.get_tpu_info()
        cap = getattr(info, "vmem_capacity_bytes", None)
    except Exception:
        cap = None
    if cap is None:
        cap = 128 * 1024 * 1024
    if cap <= 64 * 1024 * 1024:      # v7x-class: 64 MiB physical per TC
        return 20 * 1024 * 1024
    return 48 * 1024 * 1024          # v5e / v6e: 128 MiB physical


def _round_down(v, m):
    return (v // m) * m


# --------------------------------------------------------------------------
# Two-pass fallback for very large N (and for testing): pass 1 accumulates
# column sums of exp(x) with N tiled ("arbitrary", reduction axis last);
# pass 2 normalizes, fully parallel.
# --------------------------------------------------------------------------
def _softmax_two_pass(x, *, tile_bytes):
    n, d = x.shape
    itemsize = jnp.dtype(x.dtype).itemsize
    tile_bytes = min(tile_bytes, 2 * 1024 * 1024)   # modest tiles: always fits

    # Lane-dense D tile.
    block_d = d if d <= 512 else 512
    # Row tile: multiple of 8 (or full n), targeting ~tile_bytes per buffer.
    if n <= 8:
        block_n = n
    else:
        bn = max(_round_down(tile_bytes // max(block_d * itemsize, 1), 8), 8)
        block_n = n if bn >= n else bn

    d_blocks = pl.cdiv(d, block_d)
    n_blocks = pl.cdiv(n, block_n)

    f32_copies = 1 if x.dtype == jnp.float32 else 2
    footprint = (4 * block_n * block_d * itemsize          # in + out, double-buffered
                 + block_n * block_d * 4 * f32_copies      # live f32 temps
                 + 4 * block_d * 4)                        # sums tiles
    vmem_limit = int(max(footprint * 1.25, 32 * 1024 * 1024))

    # ---- pass 1: column sums of exp(x) ----
    def colsum_kernel(x_ref, s_ref):
        i = pl.program_id(1)

        @pl.when(i == 0)
        def _():
            s_ref[...] = jnp.zeros_like(s_ref)

        e = jnp.exp(x_ref[...].astype(jnp.float32))
        if n % block_n != 0:
            # Mask padded rows of the ragged last N block out of the reduction.
            row = lax.broadcasted_iota(jnp.int32, e.shape, 0) + i * block_n
            e = jnp.where(row < n, e, 0.0)
        s_ref[...] += jnp.sum(e, axis=0, keepdims=True)

    sums = pl.pallas_call(
        colsum_kernel,
        out_shape=jax.ShapeDtypeStruct((1, d), jnp.float32),
        grid=(d_blocks, n_blocks),
        in_specs=[pl.BlockSpec((block_n, block_d), lambda j, i: (i, j))],
        out_specs=pl.BlockSpec((1, block_d), lambda j, i: (0, j)),
        compiler_params=pltpu.CompilerParams(
            dimension_semantics=("parallel", "arbitrary"),
            vmem_limit_bytes=vmem_limit,
        ),
    )(x)

    # ---- pass 2: normalize ----
    def normalize_kernel(x_ref, s_ref, o_ref):
        inv = pl.reciprocal(s_ref[...], approx=False)
        o_ref[...] = (jnp.exp(x_ref[...].astype(jnp.float32)) * inv).astype(o_ref.dtype)

    return pl.pallas_call(
        normalize_kernel,
        out_shape=jax.ShapeDtypeStruct((n, d), x.dtype),
        grid=(d_blocks, n_blocks),
        in_specs=[
            pl.BlockSpec((block_n, block_d), lambda j, i: (i, j)),
            pl.BlockSpec((1, block_d), lambda j, i: (0, j)),
        ],
        out_specs=pl.BlockSpec((block_n, block_d), lambda j, i: (i, j)),
        compiler_params=pltpu.CompilerParams(
            dimension_semantics=("parallel", "parallel"),
            vmem_limit_bytes=vmem_limit,
        ),
    )(x, sums)


# --------------------------------------------------------------------------
# Public entry point
# --------------------------------------------------------------------------
def my_softmax(x, *, tile_bytes=4 * 1024 * 1024, vmem_budget_bytes=None,
               _force_two_pass=False):
    """exp(x) / sum(exp(x), dim=0) for a 2-D input via Pallas TPU kernels."""
    assert x.ndim == 2, "kernel is written for 2-D inputs [N, D]"
    n, d = x.shape
    itemsize = jnp.dtype(x.dtype).itemsize
    if vmem_budget_bytes is None:
        vmem_budget_bytes = _default_vmem_budget_bytes()

    # Per-lane (per-column) VMEM bytes for the single-pass path:
    #   2x double-buffered input + 2x double-buffered output + live f32 temps
    #   (exp result, plus an f32 cast copy when the input isn't already f32).
    f32_per_lane = n * 4 * (1 if x.dtype == jnp.float32 else 2)
    per_lane = 4 * n * itemsize + f32_per_lane

    bd_budget = _round_down(vmem_budget_bytes // per_lane, 128)
    bd_target = _round_down(tile_bytes // max(n * itemsize, 1), 128)
    bd_cap = min(bd_budget, bd_target)

    block_d = None
    if bd_cap >= d:
        block_d = d                      # full width (no alignment needed)
    elif bd_cap >= 128:
        block_d = bd_cap                 # lane-dense multiple of 128
    elif d < 128 and d * per_lane <= vmem_budget_bytes:
        block_d = d                      # narrow-but-full columns still fit

    if block_d is None or _force_two_pass:
        # Even a 128-lane column stack exceeds the budget (very large N):
        # tile the reduction axis and do two passes.
        return _softmax_two_pass(x, tile_bytes=tile_bytes)

    footprint = block_d * per_lane
    vmem_limit = int(max(footprint * 1.25, 32 * 1024 * 1024))

    grid = (pl.cdiv(d, block_d),)
    return pl.pallas_call(
        _softmax_dim0_kernel,
        out_shape=jax.ShapeDtypeStruct((n, d), x.dtype),
        grid=grid,
        in_specs=[pl.BlockSpec((n, block_d), lambda j: (0, j))],
        out_specs=pl.BlockSpec((n, block_d), lambda j: (0, j)),
        compiler_params=pltpu.CompilerParams(
            # Columns are independent → parallel (megacore on v7x).
            dimension_semantics=("parallel",),
            vmem_limit_bytes=vmem_limit,
        ),
    )(x)


if __name__ == "__main__":
    key = jax.random.PRNGKey(0)

    # Small demo shape consistent with the module: seq=8, hidden=128.
    x_small = jax.random.normal(key, (8, 128), dtype=jnp.float32)
    out_small = jax.block_until_ready(my_softmax(x_small))
    ref_small = jnp.exp(x_small) / jnp.sum(jnp.exp(x_small), axis=0)
    assert out_small.shape == ref_small.shape and out_small.dtype == ref_small.dtype
    assert jnp.allclose(out_small, ref_small, atol=1e-5, rtol=1e-5)

    # Larger shape: single-pass, single wide block.
    key2 = jax.random.PRNGKey(0)
    x_big = jax.random.normal(key2, (16, 1024), dtype=jnp.float32)
    ref_big = jnp.exp(x_big) / jnp.sum(jnp.exp(x_big), axis=0)
    out_big = jax.block_until_ready(my_softmax(x_big))
    assert jnp.allclose(out_big, ref_big, atol=1e-5, rtol=1e-5)

    # Exercise the tiled (multi-block, pipelined) single-pass path.
    out_tiled = jax.block_until_ready(my_softmax(x_big, tile_bytes=8192))
    assert jnp.allclose(out_tiled, ref_big, atol=1e-5, rtol=1e-5)

    # Exercise the large-N two-pass fallback path.
    out_2p = jax.block_until_ready(my_softmax(x_big, _force_two_pass=True))
    assert jnp.allclose(out_2p, ref_big, atol=1e-5, rtol=1e-5)

    print("KERNEL_OK")
</pallas_src>

<mosaic_0001>
module attributes {stable_mosaic.version = 11 : i64} {
  func.func @_softmax_dim0_kernel(%arg0: i32, %arg1: memref<8x128xf32, #tpu.memory_space<vmem>>, %arg2: memref<8x128xf32, #tpu.memory_space<vmem>>) attributes {dimension_semantics = [#tpu.dimension_semantics<parallel>], iteration_bounds = array<i64: 1>, scalar_prefetch = 0 : i64, scratch_operands = 0 : i64, tpu.core_type = #tpu.core_type<tc>, window_params = [{transform_indices = @transform_0, window_bounds = array<i64: 8, 128>}, {transform_indices = @transform_1, window_bounds = array<i64: 8, 128>}]} {
    %c0 = arith.constant 0 : index
    %c0_0 = arith.constant 0 : index
    %0 = vector.load %arg1[%c0, %c0_0] : memref<8x128xf32, #tpu.memory_space<vmem>>, vector<8x128xf32>
    %1 = math.exp %0 : vector<8x128xf32>
    %cst = arith.constant dense<0.000000e+00> : vector<128xf32>
    %2 = vector.multi_reduction <add>, %1, %cst [0] : vector<8x128xf32> to vector<128xf32>
    %3 = vector.shape_cast %2 : vector<128xf32> to vector<1x128xf32>
    %4 = tpu.reciprocal %3 : vector<1x128xf32> -> vector<1x128xf32>
    %5 = vector.broadcast %4 : vector<1x128xf32> to vector<8x128xf32>
    %6 = arith.mulf %1, %5 : vector<8x128xf32>
    %c0_1 = arith.constant 0 : index
    %c0_2 = arith.constant 0 : index
    %7 = vector.load %arg2[%c0_1, %c0_2] : memref<8x128xf32, #tpu.memory_space<vmem>>, vector<8x128xf32>
    tpu.vector_store %arg2[%c0_1, %c0_2], %6 {strides = array<i32>} : memref<8x128xf32, #tpu.memory_space<vmem>>, vector<8x128xf32>,
    return
  }
  func.func @transform_0(%arg0: i32) -> (i32, i32) {
    %c0_i32 = arith.constant 0 : i32
    %c0_i32_0 = arith.constant 0 : i32
    return %c0_i32, %arg0 : i32, i32
  }
  func.func @transform_1(%arg0: i32) -> (i32, i32) {
    %c0_i32 = arith.constant 0 : i32
    %c0_i32_0 = arith.constant 0 : i32
    return %c0_i32, %arg0 : i32, i32
  }
}

</mosaic_0001>

<llo_original>
// kernel: tpu_custom_call.1
$region0: #{tpu_custom_call.1}
  #allocation0 [shape = 'u32[]', space=smem, size = 0x4, offset = 0x4, fixed_abs, tag = 'smem constant byte address 0x4 - core index']
  #allocation1 [shape = 'u32[144,128]{1,0:T(1,128)}', space=vmem, size = 0x12000, scoped, tag = 'internal scratch']
  %s0 = inlined_call_operand.hbm [shape: f32[8,128], index: 0, kind: input, shape index: {}]
  %s1 = inlined_call_operand.hbm [shape: f32[8,128], index: 1, kind: output, shape index: {}]
  %s2 = sld [smem:[#allocation0]]
  $region18: #{tpu_custom_call.1} parent=0
    _
  %s4 = ssub.s32 1, %s2
  %s5 = scalar_select 0, %s4, %s2
  $region1: #{tpu_custom_call.1} parent=0
    #allocation2 [shape = 'u8[4096]{0}', space=vmem, size = 0x1000, scoped, tag = 'input window, operand 0, single buffered']
    #allocation3 [shape = 's32[1]{0}', space=sflag, size = 0x4, scoped, tag = 'scoped memory for tpu_custom_call.1']
    #allocation4 [shape = 's32[1]{0}', space=sflag, size = 0x4, scoped, tag = 'scoped memory for tpu_custom_call.1']
    #allocation5 [shape = 'u8[4096]{0}', space=vmem, size = 0x1000, scoped, tag = 'output window, operand 0, single buffered']
    %6 = vsyncpa [#allocation3], 0
    %7 = vsyncpa [#allocation4], 0
    // Predicated region
    $region2: #{tpu_custom_call.1} parent=1 // pred_check
      _
    $region3: #{tpu_custom_call.1} parent=1 // pred_check_branch
      %9 = sbr.rel (0) target = $region5
    $region4: #{tpu_custom_call.1} parent=1 // pred_region
      %s11 = ssub.s32 128, 128
      %12 = vsyncadd [#allocation3], %s11
      %s14 = sshll.u32 [#allocation2], 4
      %s15 = int_to_ptr.vmem [resolvable:$true] %s14
      %17 = dma.hbm_to_vmem [thread:$0]  %s0, 128, %s15, [#allocation3]
    $region5: #{tpu_custom_call.1} parent=1 // pred_fallthru
      _
    // Predicated region
    $region6: #{tpu_custom_call.1} parent=1 // pred_check
      _
    $region7: #{tpu_custom_call.1} parent=1 // pred_check_branch
      %19 = sbr.rel (0) target = $region9
    $region8: #{tpu_custom_call.1} parent=1 // pred_region
      %20 = dma.done [#allocation3], 128
    $region9: #{tpu_custom_call.1} parent=1 // pred_fallthru
      _
    %v21 = vld [vmem:[#allocation2] sm:$0xff]
    %v22 = vmul.f32 %v21, 1.442695
    %v23 = vpow.pop %v22
    %v24 = vrot.slane %v23, 4
    %v25 = vadd.f32 %v23, %v24
    %v26 = vrot.slane %v25, 2
    %v27 = vadd.f32 %v25, %v26
    %v28 = vrot.slane %v27, 1
    %v29 = vadd.f32 %v27, %v28
    %v30 = vrcp.pop %v29
    %v31 = vmul.f32 %v23, %v30
    %32 = vst [vmem:[#allocation5] sm:$0xff] %v31
    // Predicated region
    $region10: #{tpu_custom_call.1} parent=1 // pred_check
      _
    $region11: #{tpu_custom_call.1} parent=1 // pred_check_branch
      %34 = sbr.rel (0) target = $region13
    $region12: #{tpu_custom_call.1} parent=1 // pred_region
      %s36 = ssub.s32 128, 128
      %37 = vsyncadd [#allocation4], %s36
      %s39 = sshll.u32 [#allocation5], 4
      %s40 = int_to_ptr.vmem [resolvable:$true] %s39
      %42 = dma.vmem_to_hbm [thread:$0]  %s40, 128, %s1, [#allocation4]
    $region13: #{tpu_custom_call.1} parent=1 // pred_fallthru
      _
    // Predicated region
    $region14: #{tpu_custom_call.1} parent=1 // pred_check
      _
    $region15: #{tpu_custom_call.1} parent=1 // pred_check_branch
      %44 = sbr.rel (0) target = $region17
    $region16: #{tpu_custom_call.1} parent=1 // pred_region
      %45 = dma.done [#allocation4], 128
    $region17: #{tpu_custom_call.1} parent=1 // pred_fallthru
      _
    %46 = vsyncpa [#allocation3], 1
    %47 = vsyncpa [#allocation4], 1

</llo_original>
